<compile_context>
chip_gen: v7x
topology: tpu7x:2x2x1
jax: 0.10.0
libtpu: 0.0.40
codegen_flags: <defaults>
</compile_context>

<pallas_src>
import functools

import jax
import jax.numpy as jnp
from jax.experimental import pallas as pl
from jax.experimental.pallas import tpu as pltpu

# ---- small, module-consistent configuration -------------------------------
B = 2            # batch_size
S = 8            # sequence_length
D = 32           # config.hidden_size
NUM_LABELS = 5   # num_labels


def _round_up(x, m):
    return (x + m - 1) // m * m


# ---- Pallas kernel ---------------------------------------------------------
def seq_labelling_kernel(x_ref, p_ref, o_ref, *, d):
    """Per-token linear classifier: o = x @ W + b (W, b packed in one slab).

    x_ref: (TM, d)            bf16 row tile of flattened tokens
    p_ref: (rows_slab, N_pad) bf16 packed params; rows 0:d = W^T, row d = bias
    o_ref: (TM, N_pad)        bf16 lane-dense logits tile
    """
    w = p_ref[0:d, :]                            # (d, N_pad) bf16, static slice
    b = p_ref[d:d + 1, :].astype(jnp.float32)    # (1, N_pad) f32 bias row
    acc = jnp.dot(x_ref[...], w, preferred_element_type=jnp.float32)  # f32 MXU acc
    o_ref[...] = (acc + b).astype(o_ref.dtype)


# ---- wrapper ---------------------------------------------------------------
def sequence_labelling_head(sequence_output, weight, bias, *, tile_rows=1024,
                            min_pallas_rows=256, force_pallas=False):
    """SequenceLabellingHead.forward (eval mode, no loss).

    sequence_output: (B, S, D)        -- bert(...)[0]
    weight:          (num_labels, D)  -- nn.Linear(hidden_size, num_labels).weight
    bias:            (num_labels,)    -- nn.Linear(...).bias
    returns logits:  (B, S, num_labels) bf16
    """
    bb, ss, dd = sequence_output.shape
    n = weight.shape[0]
    rows = bb * ss

    # Tiny heads: a single fused XLA einsum beats pallas_call launch overhead.
    if rows < min_pallas_rows and not force_pallas:
        acc = jnp.einsum(
            "bsd,nd->bsn",
            sequence_output.astype(jnp.bfloat16),
            weight.astype(jnp.bfloat16),
            preferred_element_type=jnp.float32,
        ) + bias.astype(jnp.float32)
        return acc.astype(jnp.bfloat16)

    n_pad = _round_up(max(n, 128), 128)          # lane-dense columns

    # Flatten tokens; bf16 halves the dominant HBM read stream. No row padding:
    # Pallas masks the partial edge block itself.
    x = sequence_output.reshape(rows, dd).astype(jnp.bfloat16)

    # Pack W^T and bias into one pre-padded bf16 slab -> single parameter DMA.
    rows_slab = _round_up(dd + 1, 16)            # bf16 sublane-pair aligned
    params = jnp.zeros((rows_slab, n_pad), jnp.bfloat16)
    params = params.at[0:dd, 0:n].set(weight.T.astype(jnp.bfloat16))
    params = params.at[dd, 0:n].set(bias.astype(jnp.bfloat16))

    # Row tile: multiple of 8, <= tile_rows, and capped at ceil(rows/2) so the
    # grid always has >= 2 steps (v7x megacore split needs >1 iteration).
    half_rows = _round_up(-(-rows // 2), 8)
    tm = max(8, min(_round_up(tile_rows, 8), half_rows))
    grid = (pl.cdiv(rows, tm),)

    out = pl.pallas_call(
        functools.partial(seq_labelling_kernel, d=dd),
        out_shape=jax.ShapeDtypeStruct((rows, n_pad), jnp.bfloat16),
        grid_spec=pltpu.PrefetchScalarGridSpec(
            num_scalar_prefetch=0,
            grid=grid,
            in_specs=[
                pl.BlockSpec((tm, dd), lambda i: (i, 0)),            # token rows
                pl.BlockSpec((rows_slab, n_pad), lambda i: (0, 0)),  # packed params
            ],
            out_specs=pl.BlockSpec((tm, n_pad), lambda i: (i, 0)),
        ),
        compiler_params=pltpu.CompilerParams(
            # Row tiles are independent -> megacore split on v7x.
            dimension_semantics=("parallel",),
        ),
    )(x, params)

    return out[:, :n].reshape(bb, ss, n)


# ---- pure-JAX reference -----------------------------------------------------
def ref_head(sequence_output, weight, bias):
    # dropout = identity in eval mode
    return jnp.einsum("bsd,nd->bsn", sequence_output, weight) + bias


if __name__ == "__main__":
    key = jax.random.PRNGKey(0)
    k_x, k_w, k_b = jax.random.split(key, 3)

    # sequence_output: what `bert(...)[0]` would return, shape (B, S, D)
    sequence_output = 0.5 * jax.random.normal(k_x, (B, S, D), dtype=jnp.float32)
    weight = 0.1 * jax.random.normal(k_w, (NUM_LABELS, D), dtype=jnp.float32)
    bias = 0.1 * jax.random.normal(k_b, (NUM_LABELS,), dtype=jnp.float32)

    # force_pallas=True so the toy shapes exercise the kernel path
    # (in production the tiny-head fallback would kick in below 256 tokens).
    logits = sequence_labelling_head(sequence_output, weight, bias,
                                     force_pallas=True)
    logits = jax.block_until_ready(logits)

    expected = ref_head(sequence_output, weight, bias)
    assert logits.shape == (B, S, NUM_LABELS)
    # bf16 inputs/outputs vs. f32 reference -> relaxed tolerance.
    assert jnp.allclose(logits.astype(jnp.float32), expected,
                        atol=3e-2, rtol=3e-2), (
        "Pallas kernel output does not match reference")
    print("KERNEL_OK")
</pallas_src>

<mosaic_0001>
module attributes {stable_mosaic.version = 11 : i64} {
  func.func @seq_labelling_kernel(%arg0: i32, %arg1: memref<8x32xbf16, #tpu.memory_space<vmem>>, %arg2: memref<48x128xbf16, #tpu.memory_space<vmem>>, %arg3: memref<8x128xbf16, #tpu.memory_space<vmem>>) attributes {dimension_semantics = [#tpu.dimension_semantics<parallel>], iteration_bounds = array<i64: 2>, scalar_prefetch = 0 : i64, scratch_operands = 0 : i64, tpu.core_type = #tpu.core_type<tc>, window_params = [{transform_indices = @transform_0, window_bounds = array<i64: 8, 32>}, {pipeline_mode = #tpu.pipeline_mode<synchronous>, transform_indices = @transform_1, window_bounds = array<i64: 48, 128>}, {transform_indices = @transform_2, window_bounds = array<i64: 8, 128>}]} {
    %c0 = arith.constant 0 : index
    %c0_0 = arith.constant 0 : index
    %0 = vector.load %arg2[%c0, %c0_0] : memref<48x128xbf16, #tpu.memory_space<vmem>>, vector<32x128xbf16>
    %c32 = arith.constant 32 : index
    %c0_1 = arith.constant 0 : index
    %1 = vector.load %arg2[%c32, %c0_1] : memref<48x128xbf16, #tpu.memory_space<vmem>>, vector<1x128xbf16>
    %2 = arith.extf %1 : vector<1x128xbf16> to vector<1x128xf32>
    %c0_2 = arith.constant 0 : index
    %c0_3 = arith.constant 0 : index
    %3 = vector.load %arg1[%c0_2, %c0_3] : memref<8x32xbf16, #tpu.memory_space<vmem>>, vector<8x32xbf16>
    %cst = arith.constant dense<0.000000e+00> : vector<8x128xf32>
    %4 = tpu.matmul %3, %0, %cst {dimension_numbers = #tpu.dot_dimension_numbers<[1], [0], [0], [1], [0, 0, 1, 1], [], []>} : vector<8x32xbf16>, vector<32x128xbf16>, vector<8x128xf32> -> vector<8x128xf32>
    %5 = vector.broadcast %2 : vector<1x128xf32> to vector<8x128xf32>
    %6 = arith.addf %4, %5 : vector<8x128xf32>
    %7 = arith.truncf %6 : vector<8x128xf32> to vector<8x128xbf16>
    %c0_4 = arith.constant 0 : index
    %c0_5 = arith.constant 0 : index
    %8 = vector.load %arg3[%c0_4, %c0_5] : memref<8x128xbf16, #tpu.memory_space<vmem>>, vector<8x128xbf16>
    tpu.vector_store %arg3[%c0_4, %c0_5], %7 {strides = array<i32>} : memref<8x128xbf16, #tpu.memory_space<vmem>>, vector<8x128xbf16>,
    return
  }
  func.func @transform_0(%arg0: i32) -> (i32, i32) {
    %c0_i32 = arith.constant 0 : i32
    %c0_i32_0 = arith.constant 0 : i32
    return %arg0, %c0_i32 : i32, i32
  }
  func.func @transform_1(%arg0: i32) -> (i32, i32) {
    %c0_i32 = arith.constant 0 : i32
    %c0_i32_0 = arith.constant 0 : i32
    %c0_i32_1 = arith.constant 0 : i32
    return %c0_i32, %c0_i32_0 : i32, i32
  }
  func.func @transform_2(%arg0: i32) -> (i32, i32) {
    %c0_i32 = arith.constant 0 : i32
    %c0_i32_0 = arith.constant 0 : i32
    return %arg0, %c0_i32 : i32, i32
  }
}

</mosaic_0001>

<llo_original>
// kernel: tpu_custom_call.1
$region0: #{tpu_custom_call.1}
  #allocation0 [shape = 'u32[]', space=smem, size = 0x4, offset = 0x4, fixed_abs, tag = 'smem constant byte address 0x4 - core index']
  #allocation1 [shape = 'u32[144,128]{1,0:T(1,128)}', space=vmem, size = 0x12000, scoped, tag = 'internal scratch']
  %s0 = inlined_call_operand.hbm [shape: bf16[16,32], index: 0, kind: input, shape index: {}]
  %s1 = inlined_call_operand.hbm [shape: bf16[48,128], index: 1, kind: input, shape index: {}]
  %s2 = inlined_call_operand.hbm [shape: bf16[16,128], index: 2, kind: output, shape index: {}]
  %s3 = sld [smem:[#allocation0]]
  $region49: #{tpu_custom_call.1} parent=0
    _
  %s5 = ssub.s32 1, %s3
  %s6 = scalar_select 0, %s5, %s3
  $region1: #{tpu_custom_call.1} parent=0
    #allocation2 [shape = 'u8[4096]{0}', space=vmem, size = 0x1000, scoped, tag = 'input window, operand 0']
    #allocation3 [shape = 's32[2]{0}', space=sflag, size = 0x8, scoped, tag = 'scoped memory for tpu_custom_call.1']
    #allocation4 [shape = 's32[2]{0}', space=sflag, size = 0x8, scoped, tag = 'scoped memory for tpu_custom_call.1']
    #allocation5 [shape = 'u8[12288]{0}', space=vmem, size = 0x3000, scoped, tag = 'input window, operand 1, single buffered']
    #allocation6 [shape = 's32[1]{0}', space=sflag, size = 0x4, scoped, tag = 'scoped memory for tpu_custom_call.1']
    #allocation7 [shape = 'u8[4096]{0}', space=vmem, size = 0x1000, scoped, tag = 'output window, operand 0']
    %7 = vsyncpa [#allocation3], 0
    %s8 = scalar_lea.sflag [#allocation3], 1
    %9 = vsyncpa %s8, 0
    %10 = vsyncpa [#allocation6], 0
    %11 = vsyncpa [#allocation4], 0
    %s12 = scalar_lea.sflag [#allocation4], 1
    %13 = vsyncpa %s12, 0
    loop: start=0, step=1, limit=4
    $region2: #{tpu_custom_call.1} parent=1 // loop_pre_header
      _
    $region3: #{tpu_custom_call.1} parent=1 // loop_header
      %s15 = sphi 0, %s19
      %p16 = scmp.ge.s32.totalorder %s15, 4
      %s25 = sphi 0, %s27
      %s28 = sphi 0, %s25
      %s29 = sphi 0, %s28
      %s45 = sphi 0, %s29
      %s49 = sphi 0, %s49
      %s51 = sphi 0, %s49
      %s52 = sphi 0, %s51
      %s66 = sphi 0, %s52
      %s72 = sphi 0, %s74
      %s75 = sphi 0, %s72
      %s76 = sphi 0, %s75
      %s92 = sphi 0, %s76
    $region4: #{tpu_custom_call.1} parent=1 // loop_header_branch
      %18 = sbr.rel (%p16) target = $region8
    $region5: #{tpu_custom_call.1} parent=1 // loop_body
      %s20 = ssub.s32 %s15, 1
      %s21 = ssub.s32 %s15, 2
      %s22 = sadd.s32 %s15, 1
      %s23 = ssub.s32 %s15, %s22
      %p24 = scmp.eq.s32.totalorder %s23, 0
      %s26 = sadd.s32 %s25, 1
      %s27 = scalar_select %p24, %s25, %s26
      %p30 = pneg %p24
      %p31 = scmp.eq.s32.totalorder %s15, 1
      %p32 = por %p30, %p31
      %p33 = scmp.ne.s32.totalorder %s25, %s28
      %p34 = scmp.eq.s32.totalorder %s15, 0
      %p35 = por %p33, %p34
      %p36 = scmp.ne.s32.totalorder %s25, %s28
      %p37 = scmp.eq.s32.totalorder %s20, 1
      %p38 = por %p36, %p37
      %p39 = scmp.ne.s32.totalorder %s28, %s29
      %p40 = scmp.eq.s32.totalorder %s20, 0
      %p41 = por %p39, %p40
      %p42 = scmp.ne.s32.totalorder %s28, %s29
      %p43 = scmp.eq.s32.totalorder %s21, 1
      %p44 = por %p42, %p43
      %p46 = scmp.ne.s32.totalorder %s29, %s45
      %p47 = scmp.eq.s32.totalorder %s21, 0
      %p48 = por %p46, %p47
      %s50 = sadd.s32 %s49, 1
      %p53 = scmp.eq.s32.totalorder %s15, 1
      %p54 = scmp.ne.s32.totalorder %s49, %s51
      %p55 = scmp.eq.s32.totalorder %s15, 0
      %p56 = por %p54, %p55
      %p57 = scmp.ne.s32.totalorder %s49, %s51
      %p58 = scmp.eq.s32.totalorder %s20, 1
      %p59 = por %p57, %p58
      %p60 = scmp.ne.s32.totalorder %s51, %s52
      %p61 = scmp.eq.s32.totalorder %s20, 0
      %p62 = por %p60, %p61
      %p63 = scmp.ne.s32.totalorder %s51, %s52
      %p64 = scmp.eq.s32.totalorder %s21, 1
      %p65 = por %p63, %p64
      %p67 = scmp.ne.s32.totalorder %s52, %s66
      %p68 = scmp.eq.s32.totalorder %s21, 0
      %p69 = por %p67, %p68
      %s70 = ssub.s32 %s15, %s22
      %p71 = scmp.eq.s32.totalorder %s70, 0
      %s73 = sadd.s32 %s72, 1
      %s74 = scalar_select %p71, %s72, %s73
      %p77 = pneg %p71
      %p78 = scmp.eq.s32.totalorder %s15, 1
      %p79 = por %p77, %p78
      %p80 = scmp.ne.s32.totalorder %s72, %s75
      %p81 = scmp.eq.s32.totalorder %s15, 0
      %p82 = por %p80, %p81
      %p83 = scmp.ne.s32.totalorder %s72, %s75
      %p84 = scmp.eq.s32.totalorder %s20, 1
      %p85 = por %p83, %p84
      %p86 = scmp.ne.s32.totalorder %s75, %s76
      %p87 = scmp.eq.s32.totalorder %s20, 0
      %p88 = por %p86, %p87
      %p89 = scmp.ne.s32.totalorder %s75, %s76
      %p90 = scmp.eq.s32.totalorder %s21, 1
      %p91 = por %p89, %p90
      %p93 = scmp.ne.s32.totalorder %s76, %s92
      %p94 = scmp.eq.s32.totalorder %s21, 0
      %p95 = por %p93, %p94
      %p96 = scmp.le.s32.totalorder 1, %s15
      %p97 = scmp.lt.s32.totalorder %s15, 3
      %p98 = pnand %p96, %p97
      %p99 = pneg %p98
      // Predicated region
      $region9: #{tpu_custom_call.1} parent=5 // pred_check
        _
      $region10: #{tpu_custom_call.1} parent=5 // pred_check_branch
        %101 = sbr.rel (%p98) target = $region12
      $region11: #{tpu_custom_call.1} parent=5 // pred_region
        %s102 = ssub.s32 %s15, 1
        // Predicated region
        $region13: #{tpu_custom_call.1} parent=11 // pred_check
          %p103 = pneg %p62
        $region14: #{tpu_custom_call.1} parent=11 // pred_check_branch
          %105 = sbr.rel (%p103) target = $region16
        $region15: #{tpu_custom_call.1} parent=11 // pred_region
          %s107 = ssub.s32 384, 384
          %108 = vsyncadd [#allocation6], %s107
          %s109 = sshll.u32 [#allocation5], 4
          %s110 = int_to_ptr.vmem [resolvable:$true] %s109
          %115 = dma.hbm_to_vmem [thread:$0]  %s1, 384, %s110, [#allocation6], 64, 64, 4
        $region16: #{tpu_custom_call.1} parent=11 // pred_fallthru
          _
      $region12: #{tpu_custom_call.1} parent=5 // pred_fallthru
        _
      %p116 = scmp.lt.s32.totalorder %s15, 2
      // Predicated region
      $region17: #{tpu_custom_call.1} parent=5 // pred_check
        %p117 = pneg %p116
      $region18: #{tpu_custom_call.1} parent=5 // pred_check_branch
        %119 = sbr.rel (%p117) target = $region20
      $region19: #{tpu_custom_call.1} parent=5 // pred_region
        // Predicated region
        $region21: #{tpu_custom_call.1} parent=19 // pred_check
          %p120 = pneg %p35
        $region22: #{tpu_custom_call.1} parent=19 // pred_check_branch
          %122 = sbr.rel (%p120) target = $region24
        $region23: #{tpu_custom_call.1} parent=19 // pred_region
          %s123 = sand.u32 %s25, 1
          %s124 = scalar_lea.sflag [#allocation3], %s123
          %s125 = sand.u32 %s25, 1
          %s126 = smul.addr %s125, 4
          %s127 = scalar_lea.vmem [#allocation2], %s126
          %s129 = ssub.s32 64, 64
          %130 = vsyncadd %s124, %s129
          %s131 = smul.addr %s15, 64
          %s132 = scalar_lea.hbm %s0, %s131
          %s134 = sshll.u32 %s127, 4
          %s135 = int_to_ptr.vmem [resolvable:$true] %s134
          %137 = dma.hbm_to_vmem [thread:$0]  %s132, 64, %s135, %s124
        $region24: #{tpu_custom_call.1} parent=19 // pred_fallthru
          _
      $region20: #{tpu_custom_call.1} parent=5 // pred_fallthru
        _
      %p138 = scmp.le.s32.totalorder 1, %s15
      %p139 = scmp.lt.s32.totalorder %s15, 3
      %p140 = pnand %p138, %p139
      %p141 = pneg %p140
      // Predicated region
      $region25: #{tpu_custom_call.1} parent=5 // pred_check
        _
      $region26: #{tpu_custom_call.1} parent=5 // pred_check_branch
        %143 = sbr.rel (%p140) target = $region28
      $region27: #{tpu_custom_call.1} parent=5 // pred_region
        %s144 = ssub.s32 %s15, 1
        %s145 = sand.u32 %s28, 1
        %s146 = scalar_lea.sflag [#allocation3], %s145
        %s147 = sand.u32 %s28, 1
        %s148 = smul.addr %s147, 4
        %s149 = scalar_lea.vmem [#allocation2], %s148
        // Predicated region
        $region29: #{tpu_custom_call.1} parent=27 // pred_check
          %p150 = pneg %p41
        $region30: #{tpu_custom_call.1} parent=27 // pred_check_branch
          %152 = sbr.rel (%p150) target = $region32
        $region31: #{tpu_custom_call.1} parent=27 // pred_region
          %153 = dma.done %s146, 64
        $region32: #{tpu_custom_call.1} parent=27 // pred_fallthru
          _
        // Predicated region
        $region33: #{tpu_custom_call.1} parent=27 // pred_check
          %p154 = pneg %p62
        $region34: #{tpu_custom_call.1} parent=27 // pred_check_branch
          %156 = sbr.rel (%p154) target = $region36
        $region35: #{tpu_custom_call.1} parent=27 // pred_region
          %157 = dma.done [#allocation6], 384
        $region36: #{tpu_custom_call.1} parent=27 // pred_fallthru
          _
        %s158 = sand.u32 %s28, 1
        %s159 = scalar_lea.sflag [#allocation3], %s158
        %s160 = sand.u32 %s28, 1
        %s161 = smul.addr %s160, 4
        %s162 = scalar_lea.vmem [#allocation2], %s161
        %p163 = pneg %p41
        %p164 = pneg %p38
        %p165 = pneg %p62
        %p166 = pneg %p59
        %p167 = pneg %p88
        %p168 = pneg %p85
        %s169 = sand.u32 %s75, 1
        %s170 = scalar_lea.sflag [#allocation4], %s169
        %s171 = sand.u32 %s75, 1
        %s172 = smul.addr %s171, 4
        %s173 = scalar_lea.vmem [#allocation7], %s172
        %v175 = vld [vmem:[#allocation5] sm:$0xf]
        %v176 = vld [vmem:[#allocation5 + $0x4] sm:$0xf]
        %v177 = vld [vmem:[#allocation5 + $0x8] sm:$0xf]
        %v178 = vld [vmem:[#allocation5 + $0xc] sm:$0xf]
        %v179 = vld [vmem:[#allocation5 + $0x10] sm:$0x1]
        %v180 = vunpack.c.l.bf16 %v179
        %v181 = vld [vmem:[%s149] sm:$0xf]
        %v182 = vlaneseq
        %v183 = vshrl.u32 %v182, 7
        %v184 = vsub.s32 0, %v183
        %v185 = vrot.slane %v180, %v184
        %v190 = vunpack.c.l.b16 %v175
        %v191 = vunpack.c.l.b16 %v176
        %v192 = vunpack.c.l.b16 %v177
        %v193 = vunpack.c.l.b16 %v178
        %v194 = vpack.c.b16 %v191, %v190
        %v195 = vpack.c.b16 %v193, %v192
        %vm198 = vcmask 261120
        %v200 = vsel %vm198, %v181, 0
        %202 = vmatprep.subr.bf16.mxu0 0
        %203 = vmatpush1.bf16.msra.mxu0 %v194
        %204 = vmatprep.subr.bf16.mxu0 0
        %205 = vmatpush1.bf16.msra.mxu0 %v195
        %206 = vmatprep.subr.bf16.mxu0 0
        %207 = vmatpush1.bf16.msra.mxu0 0
        %208 = vmatprep.subr.bf16.mxu0 0
        %209 = vmatpush1.bf16.msra.mxu0 0
        %210 = vmatprep.subr.bf16.mxu0 0
        %211 = vmatpush1.bf16.msra.mxu0 0
        %212 = vmatprep.subr.bf16.mxu0 0
        %213 = vmatpush1.bf16.msra.mxu0 0
        %214 = vmatprep.subr.bf16.mxu0 0
        %215 = vmatpush1.bf16.msra.mxu0 0
        %216 = vmatprep.subr.bf16.mxu0 0
        %217 = vmatpush1.bf16.msra.mxu0 0
        %218 = vmatprep.subr.bf16.mxu0 0
        %219 = vmatpush1.bf16.msra.mxu0 0
        %220 = vmatprep.subr.bf16.mxu0 0
        %221 = vmatpush1.bf16.msra.mxu0 0
        %222 = vmatprep.subr.bf16.mxu0 0
        %223 = vmatpush1.bf16.msra.mxu0 0
        %224 = vmatprep.subr.bf16.mxu0 0
        %225 = vmatpush1.bf16.msra.mxu0 0
        %226 = vmatprep.subr.bf16.mxu0 0
        %227 = vmatpush1.bf16.msra.mxu0 0
        %228 = vmatprep.subr.bf16.mxu0 0
        %229 = vmatpush1.bf16.msra.mxu0 0
        %230 = vmatprep.subr.bf16.mxu0 0
        %231 = vmatpush1.bf16.msra.mxu0 0
        %232 = vmatprep.subr.bf16.mxu0 0
        %233 = vmatpush1.bf16.msra.mxu0 0
        %234 = vmatprep.mubr.bf16.mxu0 0
        %235 = vmatmul.mubr.bf16.gmra.mrb[0].mxu0 %v200
        %v236 = vpop.f32.mrb[0].mxu0
        %v237 = vadd.f32 %v185, %v236
        %v238 = vpop.f32.mrb[0].mxu0
        %v239 = vpop.f32.mrb[0].mxu0
        %v240 = vpop.f32.mrb[0].mxu0
        %241 = vdwg.mxu0
        %v242 = vpack.c.bf16 %v237, %v237
        %243 = vst [vmem:[%s173] sm:$0xf] %v242
        %s244 = sand.u32 %s75, 1
        %s245 = scalar_lea.sflag [#allocation4], %s244
        %s246 = sand.u32 %s75, 1
        %s247 = smul.addr %s246, 4
        %s248 = scalar_lea.vmem [#allocation7], %s247
        // Predicated region
        $region37: #{tpu_custom_call.1} parent=27 // pred_check
          %p249 = pneg %p85
        $region38: #{tpu_custom_call.1} parent=27 // pred_check_branch
          %251 = sbr.rel (%p249) target = $region40
        $region39: #{tpu_custom_call.1} parent=27 // pred_region
          %s253 = ssub.s32 64, 64
          %254 = vsyncadd %s245, %s253
          %s255 = smul.addr %s20, 64
          %s256 = scalar_lea.hbm %s2, %s255
          %s258 = sshll.u32 %s248, 4
          %s259 = int_to_ptr.vmem [resolvable:$true] %s258
          %261 = dma.vmem_to_hbm [thread:$0]  %s259, 64, %s256, %s245
        $region40: #{tpu_custom_call.1} parent=27 // pred_fallthru
          _
      $region28: #{tpu_custom_call.1} parent=5 // pred_fallthru
        _
      %p262 = scmp.le.s32.totalorder 2, %s15
      // Predicated region
      $region41: #{tpu_custom_call.1} parent=5 // pred_check
        %p263 = pneg %p262
      $region42: #{tpu_custom_call.1} parent=5 // pred_check_branch
        %265 = sbr.rel (%p263) target = $region44
      $region43: #{tpu_custom_call.1} parent=5 // pred_region
        %s266 = ssub.s32 %s15, 2
        // Predicated region
        $region45: #{tpu_custom_call.1} parent=43 // pred_check
          %p267 = pneg %p91
        $region46: #{tpu_custom_call.1} parent=43 // pred_check_branch
          %269 = sbr.rel (%p267) target = $region48
        $region47: #{tpu_custom_call.1} parent=43 // pred_region
          %s270 = sand.u32 %s76, 1
          %s271 = scalar_lea.sflag [#allocation4], %s270
          %s272 = sand.u32 %s76, 1
          %s273 = smul.addr %s272, 4
          %s274 = scalar_lea.vmem [#allocation7], %s273
          %275 = dma.done %s271, 64
        $region48: #{tpu_custom_call.1} parent=43 // pred_fallthru
          _
      $region44: #{tpu_custom_call.1} parent=5 // pred_fallthru
        _
    $region6: #{tpu_custom_call.1} parent=1 // loop_footer
      %s19 = sadd.s32 1, %s15
    $region7: #{tpu_custom_call.1} parent=1 // loop_footer_branch
      %14 = sbr.rel target = $region3
    $region8: #{tpu_custom_call.1} parent=1 // loop_exit
      _
    %276 = vsyncpa [#allocation3], 1
    %s277 = scalar_lea.sflag [#allocation3], 1
    %278 = vsyncpa %s277, 1
    %279 = vsyncpa [#allocation6], 1
    %280 = vsyncpa [#allocation4], 1
    %s281 = scalar_lea.sflag [#allocation4], 1
    %282 = vsyncpa %s281, 1

</llo_original>
